<compile_context>
chip_gen: v6e
topology: v6e:2x2x1
jax: 0.10.0
libtpu: 0.0.40
codegen_flags: <defaults>
</compile_context>

<pallas_src>
import math

import jax
import jax.numpy as jnp
from jax.experimental import pallas as pl
from jax.experimental.pallas import tpu as pltpu

# ----------------------------- config ---------------------------------------
HIDDEN_SIZE = 32          # cfg.NET.HIDDEN_SIZE
FF_SIZE = 128             # cfg.NET.FF_SIZE (4 * hidden)
DROPOUT_R = 0.1           # inference: identity
LR_MUL = 0.01             # lr_mlp passed to EqualLinear

SQRT2 = math.sqrt(2.0)
NEG_SLOPE = 0.2


# ----------------------------- kernel ---------------------------------------
def ffn_kernel(x_ref, p1_ref, p2_ref, out_ref):
    # x_ref : (B*S, H)
    # p1_ref: (H+1, FF)  rows 0..H-1 = (W1*s1).T, row H = b1*lr_mul
    # p2_ref: (FF+1, H)  rows 0..FF-1 = (W2*s2).T, row FF = b2*lr_mul
    # out_ref: (B*S, H)
    H = x_ref.shape[1]
    FF = p1_ref.shape[1]

    x = x_ref[...]
    w1 = p1_ref[:H, :]           # (H, FF), pre-scaled + pre-transposed
    b1 = p1_ref[H:H + 1, :]      # (1, FF), pre-multiplied by lr_mul
    w2 = p2_ref[:FF, :]          # (FF, H)
    b2 = p2_ref[FF:FF + 1, :]    # (1, H)

    # Layer 1: EqualLinear + StyleGAN2 fused leaky relu (bias added inside).
    h = jnp.dot(x, w1, preferred_element_type=jnp.float32) + b1
    h = jnp.where(h > 0, h, NEG_SLOPE * h) * jnp.float32(SQRT2)

    # TODO(synk): training-mode dropout (p=0.1) not implemented; inference identity.

    # Layer 2: plain EqualLinear.
    y = jnp.dot(h, w2, preferred_element_type=jnp.float32) + b2
    out_ref[...] = y.astype(out_ref.dtype)


# ----------------------------- wrapper ---------------------------------------
def prepare_ffn_params(w1, b1, w2, b2, lr_mul=LR_MUL):
    """One-time (model-init) EqualLinear scaling + transpose + bias packing.

    w1: (FF, H), b1: (FF,), w2: (H, FF), b2: (H,) -- PyTorch (out, in) layout.
    Returns two f32 slabs consumed by the kernel.
    """
    ff, h = w1.shape
    s1 = lr_mul / math.sqrt(h)
    s2 = lr_mul / math.sqrt(ff)
    p1 = jnp.concatenate([(w1 * s1).T, (b1 * lr_mul).reshape(1, ff)], axis=0)
    p2 = jnp.concatenate([(w2 * s2).T, (b2 * lr_mul).reshape(1, h)], axis=0)
    return jnp.asarray(p1, jnp.float32), jnp.asarray(p2, jnp.float32)


@jax.jit
def ffn_forward(x, p1, p2):
    """x: (B, S, H) float32; p1/p2: packed slabs from prepare_ffn_params."""
    B, S, H = x.shape
    BS = B * S
    xf = x.reshape(BS, H)        # fold batch into rows (row-major, matches ref)

    vmem = lambda: pl.BlockSpec(memory_space=pltpu.MemorySpace.VMEM)

    out2d = pl.pallas_call(
        ffn_kernel,
        out_shape=jax.ShapeDtypeStruct((BS, H), jnp.float32),
        in_specs=[vmem(), vmem(), vmem()],
        out_specs=vmem(),
    )(xf, p1, p2)

    return out2d.reshape(B, S, H)


# ----------------------------- reference (pure JAX) ---------------------------
def ffn_reference(x, params):
    w1, b1, w2, b2 = params
    B, S, H = x.shape
    FF = w1.shape[0]
    s1 = LR_MUL / math.sqrt(H)
    s2 = LR_MUL / math.sqrt(FF)

    xf = x.reshape(B * S, H)
    h = jnp.dot(xf, (w1 * s1).T, precision=jax.lax.Precision.HIGHEST)
    hb = h + b1 * LR_MUL
    h = SQRT2 * jnp.where(hb > 0, hb, NEG_SLOPE * hb)       # fused leaky relu
    # dropout: identity at inference
    y = jnp.dot(h, (w2 * s2).T, precision=jax.lax.Precision.HIGHEST) + b2 * LR_MUL
    return y.reshape(B, S, H)


# ----------------------------- main -------------------------------------------
if __name__ == "__main__":
    B, S = 2, 8

    key = jax.random.PRNGKey(0)
    k_w1, k_b1, k_w2, k_b2, k_x = jax.random.split(key, 5)

    # EqualLinear stores weight as randn(out, in) / lr_mul (PyTorch (out, in)).
    w1 = jax.random.normal(k_w1, (FF_SIZE, HIDDEN_SIZE), jnp.float32) / LR_MUL
    b1 = jax.random.normal(k_b1, (FF_SIZE,), jnp.float32) / LR_MUL
    w2 = jax.random.normal(k_w2, (HIDDEN_SIZE, FF_SIZE), jnp.float32) / LR_MUL
    b2 = jax.random.normal(k_b2, (HIDDEN_SIZE,), jnp.float32) / LR_MUL
    params = (w1, b1, w2, b2)

    x = jax.random.normal(k_x, (B, S, HIDDEN_SIZE), jnp.float32)

    # Init-time param prep (hoisted out of the per-call forward).
    p1, p2 = prepare_ffn_params(*params)
    p1, p2 = jax.block_until_ready((p1, p2))

    out = ffn_forward(x, p1, p2)
    out = jax.block_until_ready(out)

    ref = ffn_reference(x, params)
    assert out.shape == (B, S, HIDDEN_SIZE)
    max_diff = float(jnp.max(jnp.abs(out - ref)))
    assert jnp.allclose(out, ref, atol=5e-4, rtol=5e-4), (
        f"mismatch vs reference: max abs diff {max_diff}")

    print("KERNEL_OK")
</pallas_src>

<mosaic_0001>
module attributes {stable_mosaic.version = 11 : i64} {
  func.func @ffn_kernel(%arg0: memref<16x32xf32, #tpu.memory_space<vmem>>, %arg1: memref<33x128xf32, #tpu.memory_space<vmem>>, %arg2: memref<129x32xf32, #tpu.memory_space<vmem>>, %arg3: memref<16x32xf32, #tpu.memory_space<vmem>>) attributes {dimension_semantics = [], scalar_prefetch = 0 : i64, scratch_operands = 0 : i64, tpu.core_type = #tpu.core_type<tc>} {
    %c0 = arith.constant 0 : index
    %c0_0 = arith.constant 0 : index
    %0 = vector.load %arg0[%c0, %c0_0] : memref<16x32xf32, #tpu.memory_space<vmem>>, vector<16x32xf32>
    %c0_1 = arith.constant 0 : index
    %c0_2 = arith.constant 0 : index
    %1 = vector.load %arg1[%c0_1, %c0_2] : memref<33x128xf32, #tpu.memory_space<vmem>>, vector<32x128xf32>
    %c32 = arith.constant 32 : index
    %c0_3 = arith.constant 0 : index
    %2 = vector.load %arg1[%c32, %c0_3] : memref<33x128xf32, #tpu.memory_space<vmem>>, vector<1x128xf32>
    %c0_4 = arith.constant 0 : index
    %c0_5 = arith.constant 0 : index
    %3 = vector.load %arg2[%c0_4, %c0_5] : memref<129x32xf32, #tpu.memory_space<vmem>>, vector<128x32xf32>
    %c128 = arith.constant 128 : index
    %c0_6 = arith.constant 0 : index
    %4 = vector.load %arg2[%c128, %c0_6] : memref<129x32xf32, #tpu.memory_space<vmem>>, vector<1x32xf32>
    %cst = arith.constant dense<0.000000e+00> : vector<16x128xf32>
    %5 = tpu.matmul %0, %1, %cst {dimension_numbers = #tpu.dot_dimension_numbers<[1], [0], [0], [1], [0, 0, 1, 1], [], []>} : vector<16x32xf32>, vector<32x128xf32>, vector<16x128xf32> -> vector<16x128xf32>
    %6 = vector.broadcast %2 : vector<1x128xf32> to vector<16x128xf32>
    %7 = arith.addf %5, %6 : vector<16x128xf32>
    %cst_7 = arith.constant 0.000000e+00 : f32
    %8 = vector.broadcast %cst_7 : f32 to vector<16x128xf32>
    %9 = arith.cmpf ogt, %7, %8 : vector<16x128xf32>
    %cst_8 = arith.constant 2.000000e-01 : f32
    %10 = vector.broadcast %cst_8 : f32 to vector<16x128xf32>
    %11 = arith.mulf %10, %7 : vector<16x128xf32>
    %12 = arith.select %9, %7, %11 : vector<16x128xi1>, vector<16x128xf32>
    %cst_9 = arith.constant 1.41421354 : f32
    %13 = vector.broadcast %cst_9 : f32 to vector<16x128xf32>
    %14 = arith.mulf %12, %13 : vector<16x128xf32>
    %cst_10 = arith.constant dense<0.000000e+00> : vector<16x32xf32>
    %15 = tpu.matmul %14, %3, %cst_10 {dimension_numbers = #tpu.dot_dimension_numbers<[1], [0], [0], [1], [0, 0, 1, 1], [], []>} : vector<16x128xf32>, vector<128x32xf32>, vector<16x32xf32> -> vector<16x32xf32>
    %16 = vector.broadcast %4 : vector<1x32xf32> to vector<16x32xf32>
    %17 = arith.addf %15, %16 : vector<16x32xf32>
    %c0_11 = arith.constant 0 : index
    %c0_12 = arith.constant 0 : index
    %18 = vector.load %arg3[%c0_11, %c0_12] : memref<16x32xf32, #tpu.memory_space<vmem>>, vector<16x32xf32>
    tpu.vector_store %arg3[%c0_11, %c0_12], %17 {strides = array<i32>} : memref<16x32xf32, #tpu.memory_space<vmem>>, vector<16x32xf32>,
    return
  }
}

</mosaic_0001>

<llo_original>
// kernel: ffn_forward.1
$region0: #{ffn_forward.1}
  #allocation0 [shape = 'u32[]', space=smem, size = 0x4, offset = 0x4, fixed_abs, tag = 'smem constant byte address 0x4 - core index']
  #allocation1 [shape = 'u32[144,128]{1,0:T(1,128)}', space=vmem, size = 0x12000, scoped, tag = 'internal scratch']
  %s0 = inlined_call_operand.vmem [shape: f32[16,32], index: 0, kind: input, shape index: {}]
  %s1 = inlined_call_operand.vmem [shape: f32[33,128], index: 1, kind: input, shape index: {}]
  %s2 = inlined_call_operand.vmem [shape: f32[129,32], index: 2, kind: input, shape index: {}]
  %s3 = inlined_call_operand.hbm [shape: f32[16,32], index: 3, kind: output, shape index: {}]
  %s4 = sld [smem:[#allocation0]]
  $region22: #{ffn_forward.1} parent=0
    _
  %s6 = ssub.s32 1, %s4
  %s7 = scalar_select 0, %s6, %s4
  $region1: #{ffn_forward.1} parent=0
    #allocation2 [shape = 'u8[8192]{0}', space=vmem, size = 0x2000, scoped, tag = 'output window, operand 0, single buffered']
    #allocation3 [shape = 's32[1]{0}', space=sflag, size = 0x4, scoped, tag = 'scoped memory for ffn_forward.1']
    %8 = vsyncpa [#allocation3], 0
    // Predicated region
    $region2: #{ffn_forward.1} parent=1 // pred_check
      _
    $region3: #{ffn_forward.1} parent=1 // pred_check_branch
      %10 = sbr.rel (0) target = $region5
    $region4: #{ffn_forward.1} parent=1 // pred_region
      _
    $region5: #{ffn_forward.1} parent=1 // pred_fallthru
      _
    // Predicated region
    $region6: #{ffn_forward.1} parent=1 // pred_check
      _
    $region7: #{ffn_forward.1} parent=1 // pred_check_branch
      %12 = sbr.rel (0) target = $region9
    $region8: #{ffn_forward.1} parent=1 // pred_region
      _
    $region9: #{ffn_forward.1} parent=1 // pred_fallthru
      _
    // Predicated region
    $region10: #{ffn_forward.1} parent=1 // pred_check
      _
    $region11: #{ffn_forward.1} parent=1 // pred_check_branch
      %14 = sbr.rel (0) target = $region13
    $region12: #{ffn_forward.1} parent=1 // pred_region
      _
    $region13: #{ffn_forward.1} parent=1 // pred_fallthru
      _
    %v15 = vld [vmem:[%s0] sm:$0xff]
    %v16 = vld [vmem:[%s0 + $0x8] sm:$0xff]
    %v17 = vld [vmem:[%s1] sm:$0xff]
    %v18 = vld [vmem:[%s1 + $0x8] sm:$0xff]
    %v19 = vld [vmem:[%s1 + $0x10] sm:$0xff]
    %v20 = vld [vmem:[%s1 + $0x18] sm:$0xff]
    %v21 = vld [vmem:[%s1 + $0x20] sm:$0x1]
    %v22 = vld [vmem:[%s2] sm:$0xff]
    %v23 = vld [vmem:[%s2 + $0x8] sm:$0xff]
    %v24 = vld [vmem:[%s2 + $0x10] sm:$0xff]
    %v25 = vld [vmem:[%s2 + $0x18] sm:$0xff]
    %v26 = vld [vmem:[%s2 + $0x20] sm:$0xff]
    %v27 = vld [vmem:[%s2 + $0x28] sm:$0xff]
    %v28 = vld [vmem:[%s2 + $0x30] sm:$0xff]
    %v29 = vld [vmem:[%s2 + $0x38] sm:$0xff]
    %v30 = vld [vmem:[%s2 + $0x40] sm:$0xff]
    %v31 = vld [vmem:[%s2 + $0x48] sm:$0xff]
    %v32 = vld [vmem:[%s2 + $0x50] sm:$0xff]
    %v33 = vld [vmem:[%s2 + $0x58] sm:$0xff]
    %v34 = vld [vmem:[%s2 + $0x60] sm:$0xff]
    %v35 = vld [vmem:[%s2 + $0x68] sm:$0xff]
    %v36 = vld [vmem:[%s2 + $0x70] sm:$0xff]
    %v37 = vld [vmem:[%s2 + $0x78] sm:$0xff]
    %v38 = vld [vmem:[%s2 + $0x80] sm:$0x1]
    %v39 = vlaneseq
    %v40 = vshrl.u32 %v39, 7
    %v41 = vsub.s32 0, %v40
    %v42 = vrot.slane %v21, %v41
    %vm43 = vcmask 261120
    %v45 = vsel %vm43, %v15, 0
    %v48 = vsel %vm43, %v16, 0
    %50 = vmatprep.subr.mxu0 0.0
    %51 = vmatpush1.msra.mxu0 0.0
    %52 = vmatprep.subr.mxu0 0.0
    %53 = vmatpush1.msra.mxu0 0.0
    %54 = vmatprep.subr.mxu0 0.0
    %55 = vmatpush1.msra.mxu0 0.0
    %56 = vmatprep.subr.mxu0 0.0
    %57 = vmatpush1.msra.mxu0 0.0
    %58 = vmatprep.subr.mxu0 0.0
    %59 = vmatpush1.msra.mxu0 0.0
    %60 = vmatprep.subr.mxu0 0.0
    %61 = vmatpush1.msra.mxu0 0.0
    %62 = vmatprep.subr.mxu0 0.0
    %63 = vmatpush1.msra.mxu0 0.0
    %64 = vmatprep.subr.mxu0 0.0
    %65 = vmatpush1.msra.mxu0 0.0
    %66 = vmatprep.subr.mxu0 0.0
    %67 = vmatpush1.msra.mxu0 0.0
    %68 = vmatprep.subr.mxu0 0.0
    %69 = vmatpush1.msra.mxu0 0.0
    %70 = vmatprep.subr.mxu0 0.0
    %71 = vmatpush1.msra.mxu0 0.0
    %72 = vmatprep.subr.mxu0 0.0
    %73 = vmatpush1.msra.mxu0 0.0
    %74 = vmatprep.subr.mxu0 0.0
    %75 = vmatpush1.msra.mxu0 %v20
    %76 = vmatprep.subr.mxu0 0.0
    %77 = vmatpush1.msra.mxu0 %v19
    %78 = vmatprep.subr.mxu0 0.0
    %79 = vmatpush1.msra.mxu0 %v18
    %80 = vmatprep.subr.mxu0 0.0
    %81 = vmatpush1.msra.mxu0 %v17
    %82 = vmatprep.subr.mxu0 0.0
    %83 = vmatpush2.msra.mxu0 0.0
    %84 = vmatprep.subr.mxu0 0.0
    %85 = vmatpush2.msra.mxu0 0.0
    %86 = vmatprep.subr.mxu0 0.0
    %87 = vmatpush2.msra.mxu0 0.0
    %88 = vmatprep.subr.mxu0 0.0
    %89 = vmatpush2.msra.mxu0 0.0
    %90 = vmatprep.subr.mxu0 0.0
    %91 = vmatpush2.msra.mxu0 0.0
    %92 = vmatprep.subr.mxu0 0.0
    %93 = vmatpush2.msra.mxu0 0.0
    %94 = vmatprep.subr.mxu0 0.0
    %95 = vmatpush2.msra.mxu0 0.0
    %96 = vmatprep.subr.mxu0 0.0
    %97 = vmatpush2.msra.mxu0 0.0
    %98 = vmatprep.subr.mxu0 0.0
    %99 = vmatpush2.msra.mxu0 0.0
    %100 = vmatprep.subr.mxu0 0.0
    %101 = vmatpush2.msra.mxu0 0.0
    %102 = vmatprep.subr.mxu0 0.0
    %103 = vmatpush2.msra.mxu0 0.0
    %104 = vmatprep.subr.mxu0 0.0
    %105 = vmatpush2.msra.mxu0 0.0
    %106 = vmatprep.subr.mxu0 0.0
    %107 = vmatpush2.msra.mxu0 0.0
    %108 = vmatprep.subr.mxu0 0.0
    %109 = vmatpush2.msra.mxu0 0.0
    %110 = vmatprep.subr.mxu0 0.0
    %111 = vmatpush2.msra.mxu0 0.0
    %112 = vmatprep.subr.mxu0 0.0
    %113 = vmatpush2.msra.mxu0 0.0
    %114 = vmatprep.mubr.f32.mxu0 0.0
    %115 = vmatmul.mubr.f32.gmra.mxu0 %v45
    %v116 = vpop.f32.mrf.mxu0
    %v117 = vadd.f32 %v42, %v116
    %v118 = vpop.f32.mrf.mxu0
    %119 = vmatprep.mubr.f32.mxu0 0.0
    %120 = vmatmul.mubr.f32.gmra.mxu0 %v48
    %v121 = vpop.f32.mrf.mxu0
    %v122 = vadd.f32 %v42, %v121
    %v123 = vpop.f32.mrf.mxu0
    %124 = vdwg.mxu0
    %vm125 = vcmp.gt.f32.partialorder %v117, 0.0
    %vm126 = vcmp.gt.f32.partialorder %v122, 0.0
    %v127 = vmul.f32 %v117, 0.2
    %v128 = vmul.f32 %v122, 0.2
    %v129 = vsel %vm125, %v117, %v127
    %v130 = vsel %vm126, %v122, %v128
    %v131 = vmul.f32 %v129, 1.4142135
    %v132 = vmul.f32 %v130, 1.4142135
    %v133 = vlaneseq
    %v134 = vshrl.u32 %v133, 7
    %v135 = vsub.s32 0, %v134
    %v136 = vrot.slane %v38, %v135
    %137 = vmatprep.subr.mxu0 0.0
    %138 = vmatpush1.msra.mxu0 %v37
    %139 = vmatprep.subr.mxu0 0.0
    %140 = vmatpush1.msra.mxu0 %v36
    %141 = vmatprep.subr.mxu0 0.0
    %142 = vmatpush1.msra.mxu0 %v35
    %143 = vmatprep.subr.mxu0 0.0
    %144 = vmatpush1.msra.mxu0 %v34
    %145 = vmatprep.subr.mxu0 0.0
    %146 = vmatpush1.msra.mxu0 %v33
    %147 = vmatprep.subr.mxu0 0.0
    %148 = vmatpush1.msra.mxu0 %v32
    %149 = vmatprep.subr.mxu0 0.0
    %150 = vmatpush1.msra.mxu0 %v31
    %151 = vmatprep.subr.mxu0 0.0
    %152 = vmatpush1.msra.mxu0 %v30
    %153 = vmatprep.subr.mxu0 0.0
    %154 = vmatpush1.msra.mxu0 %v29
    %155 = vmatprep.subr.mxu0 0.0
    %156 = vmatpush1.msra.mxu0 %v28
    %157 = vmatprep.subr.mxu0 0.0
    %158 = vmatpush1.msra.mxu0 %v27
    %159 = vmatprep.subr.mxu0 0.0
    %160 = vmatpush1.msra.mxu0 %v26
    %161 = vmatprep.subr.mxu0 0.0
    %162 = vmatpush1.msra.mxu0 %v25
    %163 = vmatprep.subr.mxu0 0.0
    %164 = vmatpush1.msra.mxu0 %v24
    %165 = vmatprep.subr.mxu0 0.0
    %166 = vmatpush1.msra.mxu0 %v23
    %167 = vmatprep.subr.mxu0 0.0
    %168 = vmatpush1.msra.mxu0 %v22
    %169 = vmatprep.subr.mxu0 0.0
    %170 = vmatpush2.msra.mxu0 0.0
    %171 = vmatprep.subr.mxu0 0.0
    %172 = vmatpush2.msra.mxu0 0.0
    %173 = vmatprep.subr.mxu0 0.0
    %174 = vmatpush2.msra.mxu0 0.0
    %175 = vmatprep.subr.mxu0 0.0
    %176 = vmatpush2.msra.mxu0 0.0
    %177 = vmatprep.subr.mxu0 0.0
    %178 = vmatpush2.msra.mxu0 0.0
    %179 = vmatprep.subr.mxu0 0.0
    %180 = vmatpush2.msra.mxu0 0.0
    %181 = vmatprep.subr.mxu0 0.0
    %182 = vmatpush2.msra.mxu0 0.0
    %183 = vmatprep.subr.mxu0 0.0
    %184 = vmatpush2.msra.mxu0 0.0
    %185 = vmatprep.subr.mxu0 0.0
    %186 = vmatpush2.msra.mxu0 0.0
    %187 = vmatprep.subr.mxu0 0.0
    %188 = vmatpush2.msra.mxu0 0.0
    %189 = vmatprep.subr.mxu0 0.0
    %190 = vmatpush2.msra.mxu0 0.0
    %191 = vmatprep.subr.mxu0 0.0
    %192 = vmatpush2.msra.mxu0 0.0
    %193 = vmatprep.subr.mxu0 0.0
    %194 = vmatpush2.msra.mxu0 0.0
    %195 = vmatprep.subr.mxu0 0.0
    %196 = vmatpush2.msra.mxu0 0.0
    %197 = vmatprep.subr.mxu0 0.0
    %198 = vmatpush2.msra.mxu0 0.0
    %199 = vmatprep.subr.mxu0 0.0
    %200 = vmatpush2.msra.mxu0 0.0
    %201 = vmatprep.mubr.f32.mxu0 0.0
    %202 = vmatmul.mubr.f32.gmra.mxu0 %v131
    %v203 = vpop.f32.mrf.mxu0
    %v204 = vadd.f32 %v136, %v203
    %v205 = vpop.f32.mrf.mxu0
    %206 = vmatprep.mubr.f32.mxu0 0.0
    %207 = vmatmul.mubr.f32.gmra.mxu0 %v132
    %v208 = vpop.f32.mrf.mxu0
    %v209 = vadd.f32 %v136, %v208
    %v210 = vpop.f32.mrf.mxu0
    %211 = vdwg.mxu0
    %212 = vst.msk [vmem:[#allocation2] sm:$0xff] %vm43, %v204
    %213 = vst.msk [vmem:[#allocation2 + $0x8] sm:$0xff] %vm43, %v209
    // Predicated region
    $region14: #{ffn_forward.1} parent=1 // pred_check
      _
    $region15: #{ffn_forward.1} parent=1 // pred_check_branch
      %215 = sbr.rel (0) target = $region17
    $region16: #{ffn_forward.1} parent=1 // pred_region
      %s217 = ssub.s32 256, 256
      %218 = vsyncadd [#allocation3], %s217
      %s219 = sshll.u32 [#allocation2], 4
      %s220 = int_to_ptr.vmem [resolvable:$true] %s219
      %225 = dma.vmem_to_hbm [thread:$0]  %s220, 256, %s3, [#allocation3], 128, 128, 8
    $region17: #{ffn_forward.1} parent=1 // pred_fallthru
      _
    // Predicated region
    $region18: #{ffn_forward.1} parent=1 // pred_check
      _
    $region19: #{ffn_forward.1} parent=1 // pred_check_branch
      %227 = sbr.rel (0) target = $region21
    $region20: #{ffn_forward.1} parent=1 // pred_region
      %228 = dma.done [#allocation3], 256
    $region21: #{ffn_forward.1} parent=1 // pred_fallthru
      _
    %229 = vsyncpa [#allocation3], 1

</llo_original>
